<compile_context>
chip_gen: v7x
topology: tpu7x:2x2x1
jax: 0.10.0
libtpu: 0.0.40
codegen_flags: <defaults>
</compile_context>

<pallas_src>
import jax
import jax.numpy as jnp
from jax.experimental import pallas as pl
from jax.experimental.pallas import tpu as pltpu


def _round_up(n, m):
    return ((n + m - 1) // m) * m


def dfsmn_forward(x, w_expand, b_expand, w_shrink, w_conv_left, w_conv_right=None,
                  *, lstride=1, rstride=1, use_bf16=False):
    """Fused DFSMN layer forward.

    x:            (B, T, dimproj)
    w_expand:     (dimlinear, dimproj)     nn.Linear weight (expand)
    b_expand:     (dimlinear,)             nn.Linear bias   (expand)
    w_shrink:     (dimproj, dimlinear)     nn.Linear weight (shrink, no bias)
    w_conv_left:  (dimproj, 1, lorder, 1)  depthwise Conv2d weight (causal taps)
    w_conv_right: (dimproj, 1, rorder, 1)  depthwise Conv2d weight (look-ahead) or None
    """
    B, T, Dp = x.shape
    Dl = w_expand.shape[0]
    assert w_expand.shape == (Dl, Dp)
    assert b_expand.shape == (Dl,)
    assert w_shrink.shape == (Dp, Dl)
    lorder = w_conv_left.shape[2]
    rorder = 0 if w_conv_right is None else w_conv_right.shape[2]

    f32 = jnp.float32
    mm_dtype = jnp.bfloat16 if use_bf16 else f32

    # Lane-dense feature dims (multiples of 128). Zero padding is exact: padded
    # input channels are zero and padded weight rows/cols are zero, so padded
    # output channels are exactly zero and get sliced off below.
    Dp_p = _round_up(Dp, 128)
    Dl_p = _round_up(Dl, 128)

    lpad = (lorder - 1) * lstride            # causal history needed
    rpad = rorder * rstride                  # look-ahead needed
    tp = _round_up(lpad + T + rpad, 8)       # padded-time scratch rows

    x_p = jnp.pad(x.astype(f32), ((0, 0), (0, 0), (0, Dp_p - Dp)))
    wet = jnp.pad(w_expand.T.astype(mm_dtype), ((0, Dp_p - Dp), (0, Dl_p - Dl)))
    be = jnp.pad(b_expand.astype(f32), (0, Dl_p - Dl)).reshape(1, Dl_p)
    wst = jnp.pad(w_shrink.T.astype(mm_dtype), ((0, Dl_p - Dl), (0, Dp_p - Dp)))
    wl = jnp.pad(jnp.transpose(w_conv_left[:, 0, :, 0]).astype(f32),
                 ((0, 0), (0, Dp_p - Dp)))                     # (lorder, Dp_p)
    nr = max(rorder, 1)
    if rorder > 0:
        wr = jnp.pad(jnp.transpose(w_conv_right[:, 0, :, 0]).astype(f32),
                     ((0, 0), (0, Dp_p - Dp)))                 # (rorder, Dp_p)
    else:
        wr = jnp.zeros((1, Dp_p), f32)

    def kernel(x_ref, wet_ref, be_ref, wst_ref, wl_ref, wr_ref, o_ref, p1pad_ref):
        xb = x_ref[0]                                          # (T, Dp_p) f32
        # expand -> ReLU -> shrink: both matmuls on the MXU, f32 accumulation;
        # f1 and p1 stay on-chip.
        f1 = jnp.dot(xb.astype(mm_dtype), wet_ref[...],
                     preferred_element_type=jnp.float32)
        f1 = jnp.maximum(f1 + be_ref[...], 0.0)
        p1 = jnp.dot(f1.astype(mm_dtype), wst_ref[...],
                     preferred_element_type=jnp.float32)       # (T, Dp_p) f32

        # Time-padded copy of p1 in VMEM scratch: [lpad zeros | p1 | zeros].
        # Pads are re-zeroed every step -> no cross-step state (parallel-safe).
        if lpad > 0:
            p1pad_ref[0:lpad, :] = jnp.zeros((lpad, Dp_p), jnp.float32)
        tail = tp - (lpad + T)
        if tail > 0:
            p1pad_ref[lpad + T:tp, :] = jnp.zeros((tail, Dp_p), jnp.float32)
        p1pad_ref[lpad:lpad + T, :] = p1

        # Memory block: identity + causal taps + look-ahead taps (VPU, unrolled;
        # lorder+rorder taps are negligible next to the matmuls).
        acc = p1
        wl_v = wl_ref[...]
        for k in range(lorder):
            off = k * lstride
            acc = acc + p1pad_ref[off:off + T, :] * wl_v[k:k + 1, :]
        if rorder > 0:
            wr_v = wr_ref[...]
            for k in range(rorder):
                off = lpad + (k + 1) * rstride
                acc = acc + p1pad_ref[off:off + T, :] * wr_v[k:k + 1, :]

        # Residual (kept in f32 even when the matmuls use bf16 operands).
        o_ref[0] = (xb + acc).astype(o_ref.dtype)

    grid = (B,)
    in_specs = [
        pl.BlockSpec((1, T, Dp_p), lambda b: (b, 0, 0)),   # x (residual + proj input)
        pl.BlockSpec((Dp_p, Dl_p), lambda b: (0, 0)),      # expand weight^T (resident)
        pl.BlockSpec((1, Dl_p), lambda b: (0, 0)),         # expand bias
        pl.BlockSpec((Dl_p, Dp_p), lambda b: (0, 0)),      # shrink weight^T (resident)
        pl.BlockSpec((lorder, Dp_p), lambda b: (0, 0)),    # left FIR taps
        pl.BlockSpec((nr, Dp_p), lambda b: (0, 0)),        # right FIR taps
    ]
    out_specs = pl.BlockSpec((1, T, Dp_p), lambda b: (b, 0, 0))

    # VMEM budget: double-buffered x/out blocks + resident weights + scratch.
    mm_b = jnp.dtype(mm_dtype).itemsize
    block_b = T * Dp_p * 4
    weight_b = 2 * Dp_p * Dl_p * mm_b + Dl_p * 4 + (lorder + nr) * Dp_p * 4
    scratch_b = tp * Dp_p * 4
    vmem_est = 2 * (2 * block_b) + 2 * weight_b + scratch_b
    vmem_limit = int(min(max(2 * vmem_est, 8 * 1024 * 1024), 64 * 1024 * 1024))

    flops = B * (4 * T * Dp_p * Dl_p + 2 * T * Dp_p * (lorder + rorder + 2))
    bytes_accessed = (2 * B * T * Dp_p * 4              # x in + out
                      + 2 * Dp_p * Dl_p * mm_b          # the two weight matrices
                      + Dl_p * 4 + (lorder + nr) * Dp_p * 4)

    out = pl.pallas_call(
        kernel,
        out_shape=jax.ShapeDtypeStruct((B, T, Dp_p), x.dtype),
        grid_spec=pltpu.PrefetchScalarGridSpec(
            num_scalar_prefetch=0,
            grid=grid,
            in_specs=in_specs,
            out_specs=out_specs,
            scratch_shapes=[pltpu.VMEM((tp, Dp_p), jnp.float32)],
        ),
        compiler_params=pltpu.CompilerParams(
            dimension_semantics=("parallel",),
            vmem_limit_bytes=vmem_limit),
        cost_estimate=pl.CostEstimate(flops=int(flops), transcendentals=0,
                                      bytes_accessed=int(bytes_accessed)),
    )(x_p, wet, be, wst, wl, wr)

    return out[:, :, :Dp]


def dfsmn_reference(x, w_expand, b_expand, w_shrink, w_conv_left, w_conv_right=None,
                    *, lstride=1, rstride=1):
    """Direct JAX transcription of DFSMN.forward (independent check)."""
    Dp = x.shape[-1]
    lorder = w_conv_left.shape[2]
    rorder = 0 if w_conv_right is None else w_conv_right.shape[2]

    f1 = jax.nn.relu(x @ w_expand.T + b_expand)
    p1 = f1 @ w_shrink.T
    x_per = jnp.transpose(p1[:, None, :, :], (0, 3, 2, 1))        # (B, Dp, T, 1)

    def dwconv(inp, w, dil):
        return jax.lax.conv_general_dilated(
            inp, w, window_strides=(1, 1), padding="VALID",
            rhs_dilation=(dil, 1),
            dimension_numbers=("NCHW", "OIHW", "NCHW"),
            feature_group_count=Dp)

    y_left = jnp.pad(x_per, ((0, 0), (0, 0), ((lorder - 1) * lstride, 0), (0, 0)))
    out = x_per + dwconv(y_left, w_conv_left, lstride)
    if rorder > 0:
        y_right = jnp.pad(x_per, ((0, 0), (0, 0), (0, rorder * rstride), (0, 0)))
        y_right = y_right[:, :, rstride:, :]
        out = out + dwconv(y_right, w_conv_right, rstride)
    out1 = jnp.transpose(out, (0, 3, 2, 1))[:, 0, :, :]           # (B, T, Dp)
    return x + out1


if __name__ == "__main__":
    # Small shapes consistent with the module defaults: (batch, time, dimproj)
    B, T = 2, 8
    dimproj, dimlinear = 64, 128
    lorder, rorder = 20, 1
    lstride, rstride = 1, 1

    key = jax.random.PRNGKey(0)
    kx, kew, keb, ksw, kl, kr = jax.random.split(key, 6)

    x = jax.random.normal(kx, (B, T, dimproj), dtype=jnp.float32)

    # nn.Linear-style uniform init
    b1 = 1.0 / (dimproj ** 0.5)
    w_expand = jax.random.uniform(kew, (dimlinear, dimproj), minval=-b1, maxval=b1,
                                  dtype=jnp.float32)
    b_expand = jax.random.uniform(keb, (dimlinear,), minval=-b1, maxval=b1,
                                  dtype=jnp.float32)
    b2 = 1.0 / (dimlinear ** 0.5)
    w_shrink = jax.random.uniform(ksw, (dimproj, dimlinear), minval=-b2, maxval=b2,
                                  dtype=jnp.float32)
    # depthwise Conv2d-style init (fan_in = kernel taps)
    bl = 1.0 / (lorder ** 0.5)
    w_conv_left = jax.random.uniform(kl, (dimproj, 1, lorder, 1), minval=-bl, maxval=bl,
                                     dtype=jnp.float32)
    br = 1.0 / (rorder ** 0.5)
    w_conv_right = jax.random.uniform(kr, (dimproj, 1, rorder, 1), minval=-br, maxval=br,
                                      dtype=jnp.float32)

    # f32 path
    y = dfsmn_forward(x, w_expand, b_expand, w_shrink, w_conv_left, w_conv_right,
                      lstride=lstride, rstride=rstride)
    jax.block_until_ready(y)

    y_ref = dfsmn_reference(x, w_expand, b_expand, w_shrink, w_conv_left, w_conv_right,
                            lstride=lstride, rstride=rstride)
    assert y.shape == (B, T, dimproj)
    # Tolerance covers differing default f32 MXU pass counts between the Pallas
    # dot and XLA's reference matmul/conv; structural errors would be O(1).
    assert jnp.allclose(y, y_ref, atol=2e-2, rtol=2e-2), float(jnp.max(jnp.abs(y - y_ref)))

    # bf16-operand path (perf mode for v6e/v7x); accumulation stays f32.
    y_bf16 = dfsmn_forward(x, w_expand, b_expand, w_shrink, w_conv_left, w_conv_right,
                           lstride=lstride, rstride=rstride, use_bf16=True)
    jax.block_until_ready(y_bf16)
    assert jnp.allclose(y_bf16, y_ref, atol=1e-1, rtol=1e-1)

    print("KERNEL_OK")
</pallas_src>

<mosaic_0001>
module attributes {stable_mosaic.version = 11 : i64} {
  func.func @kernel(%arg0: i32, %arg1: memref<1x8x128xf32, #tpu.memory_space<vmem>>, %arg2: memref<128x128xf32, #tpu.memory_space<vmem>>, %arg3: memref<1x128xf32, #tpu.memory_space<vmem>>, %arg4: memref<128x128xf32, #tpu.memory_space<vmem>>, %arg5: memref<20x128xf32, #tpu.memory_space<vmem>>, %arg6: memref<1x128xf32, #tpu.memory_space<vmem>>, %arg7: memref<1x8x128xf32, #tpu.memory_space<vmem>>, %arg8: memref<32x128xf32, #tpu.memory_space<vmem>>) attributes {dimension_semantics = [#tpu.dimension_semantics<parallel>], iteration_bounds = array<i64: 2>, scalar_prefetch = 0 : i64, scratch_operands = 1 : i64, tpu.core_type = #tpu.core_type<tc>, window_params = [{transform_indices = @transform_0, window_bounds = array<i64: 1, 8, 128>}, {pipeline_mode = #tpu.pipeline_mode<synchronous>, transform_indices = @transform_1, window_bounds = array<i64: 128, 128>}, {pipeline_mode = #tpu.pipeline_mode<synchronous>, transform_indices = @transform_2, window_bounds = array<i64: 1, 128>}, {pipeline_mode = #tpu.pipeline_mode<synchronous>, transform_indices = @transform_3, window_bounds = array<i64: 128, 128>}, {pipeline_mode = #tpu.pipeline_mode<synchronous>, transform_indices = @transform_4, window_bounds = array<i64: 20, 128>}, {pipeline_mode = #tpu.pipeline_mode<synchronous>, transform_indices = @transform_5, window_bounds = array<i64: 1, 128>}, {transform_indices = @transform_6, window_bounds = array<i64: 1, 8, 128>}]} {
    %c0 = arith.constant 0 : index
    %c0_0 = arith.constant 0 : index
    %c0_1 = arith.constant 0 : index
    %0 = vector.load %arg1[%c0, %c0_0, %c0_1] : memref<1x8x128xf32, #tpu.memory_space<vmem>>, vector<1x8x128xf32>
    %1 = vector.shape_cast %0 : vector<1x8x128xf32> to vector<8x128xf32>
    %c0_2 = arith.constant 0 : index
    %c0_3 = arith.constant 0 : index
    %2 = vector.load %arg2[%c0_2, %c0_3] : memref<128x128xf32, #tpu.memory_space<vmem>>, vector<128x128xf32>
    %cst = arith.constant dense<0.000000e+00> : vector<8x128xf32>
    %3 = tpu.matmul %1, %2, %cst {dimension_numbers = #tpu.dot_dimension_numbers<[1], [0], [0], [1], [0, 0, 1, 1], [], []>} : vector<8x128xf32>, vector<128x128xf32>, vector<8x128xf32> -> vector<8x128xf32>
    %c0_4 = arith.constant 0 : index
    %c0_5 = arith.constant 0 : index
    %4 = vector.load %arg3[%c0_4, %c0_5] : memref<1x128xf32, #tpu.memory_space<vmem>>, vector<1x128xf32>
    %5 = vector.broadcast %4 : vector<1x128xf32> to vector<8x128xf32>
    %6 = arith.addf %3, %5 : vector<8x128xf32>
    %cst_6 = arith.constant 0.000000e+00 : f32
    %7 = vector.broadcast %cst_6 : f32 to vector<8x128xf32>
    %8 = arith.maximumf %6, %7 : vector<8x128xf32>
    %c0_7 = arith.constant 0 : index
    %c0_8 = arith.constant 0 : index
    %9 = vector.load %arg4[%c0_7, %c0_8] : memref<128x128xf32, #tpu.memory_space<vmem>>, vector<128x128xf32>
    %cst_9 = arith.constant dense<0.000000e+00> : vector<8x128xf32>
    %10 = tpu.matmul %8, %9, %cst_9 {dimension_numbers = #tpu.dot_dimension_numbers<[1], [0], [0], [1], [0, 0, 1, 1], [], []>} : vector<8x128xf32>, vector<128x128xf32>, vector<8x128xf32> -> vector<8x128xf32>
    %cst_10 = arith.constant 0.000000e+00 : f32
    %11 = vector.broadcast %cst_10 : f32 to vector<19x128xf32>
    %c0_11 = arith.constant 0 : index
    %c0_12 = arith.constant 0 : index
    %12 = vector.load %arg8[%c0_11, %c0_12] : memref<32x128xf32, #tpu.memory_space<vmem>>, vector<19x128xf32>
    tpu.vector_store %arg8[%c0_11, %c0_12], %11 {strides = array<i32>} : memref<32x128xf32, #tpu.memory_space<vmem>>, vector<19x128xf32>,
    %cst_13 = arith.constant 0.000000e+00 : f32
    %13 = vector.broadcast %cst_13 : f32 to vector<5x128xf32>
    %c27 = arith.constant 27 : index
    %c0_14 = arith.constant 0 : index
    %14 = vector.load %arg8[%c27, %c0_14] : memref<32x128xf32, #tpu.memory_space<vmem>>, vector<5x128xf32>
    tpu.vector_store %arg8[%c27, %c0_14], %13 {strides = array<i32>} : memref<32x128xf32, #tpu.memory_space<vmem>>, vector<5x128xf32>,
    %c19 = arith.constant 19 : index
    %c0_15 = arith.constant 0 : index
    %15 = vector.load %arg8[%c19, %c0_15] : memref<32x128xf32, #tpu.memory_space<vmem>>, vector<8x128xf32>
    tpu.vector_store %arg8[%c19, %c0_15], %10 {strides = array<i32>} : memref<32x128xf32, #tpu.memory_space<vmem>>, vector<8x128xf32>,
    %c0_16 = arith.constant 0 : index
    %c0_17 = arith.constant 0 : index
    %16 = vector.load %arg5[%c0_16, %c0_17] : memref<20x128xf32, #tpu.memory_space<vmem>>, vector<20x128xf32>
    %c0_18 = arith.constant 0 : index
    %c0_19 = arith.constant 0 : index
    %17 = vector.load %arg8[%c0_18, %c0_19] : memref<32x128xf32, #tpu.memory_space<vmem>>, vector<8x128xf32>
    %18 = vector.extract_strided_slice %16 {offsets = [0, 0], sizes = [1, 128], strides = [1, 1]} : vector<20x128xf32> to vector<1x128xf32>
    %19 = vector.broadcast %18 : vector<1x128xf32> to vector<8x128xf32>
    %20 = arith.mulf %17, %19 : vector<8x128xf32>
    %21 = arith.addf %10, %20 : vector<8x128xf32>
    %c1 = arith.constant 1 : index
    %c0_20 = arith.constant 0 : index
    %22 = vector.load %arg8[%c1, %c0_20] : memref<32x128xf32, #tpu.memory_space<vmem>>, vector<8x128xf32>
    %23 = vector.extract_strided_slice %16 {offsets = [1, 0], sizes = [1, 128], strides = [1, 1]} : vector<20x128xf32> to vector<1x128xf32>
    %24 = vector.broadcast %23 : vector<1x128xf32> to vector<8x128xf32>
    %25 = arith.mulf %22, %24 : vector<8x128xf32>
    %26 = arith.addf %21, %25 : vector<8x128xf32>
    %c2 = arith.constant 2 : index
    %c0_21 = arith.constant 0 : index
    %27 = vector.load %arg8[%c2, %c0_21] : memref<32x128xf32, #tpu.memory_space<vmem>>, vector<8x128xf32>
    %28 = vector.extract_strided_slice %16 {offsets = [2, 0], sizes = [1, 128], strides = [1, 1]} : vector<20x128xf32> to vector<1x128xf32>
    %29 = vector.broadcast %28 : vector<1x128xf32> to vector<8x128xf32>
    %30 = arith.mulf %27, %29 : vector<8x128xf32>
    %31 = arith.addf %26, %30 : vector<8x128xf32>
    %c3 = arith.constant 3 : index
    %c0_22 = arith.constant 0 : index
    %32 = vector.load %arg8[%c3, %c0_22] : memref<32x128xf32, #tpu.memory_space<vmem>>, vector<8x128xf32>
    %33 = vector.extract_strided_slice %16 {offsets = [3, 0], sizes = [1, 128], strides = [1, 1]} : vector<20x128xf32> to vector<1x128xf32>
    %34 = vector.broadcast %33 : vector<1x128xf32> to vector<8x128xf32>
    %35 = arith.mulf %32, %34 : vector<8x128xf32>
    %36 = arith.addf %31, %35 : vector<8x128xf32>
    %c4 = arith.constant 4 : index
    %c0_23 = arith.constant 0 : index
    %37 = vector.load %arg8[%c4, %c0_23] : memref<32x128xf32, #tpu.memory_space<vmem>>, vector<8x128xf32>
    %38 = vector.extract_strided_slice %16 {offsets = [4, 0], sizes = [1, 128], strides = [1, 1]} : vector<20x128xf32> to vector<1x128xf32>
    %39 = vector.broadcast %38 : vector<1x128xf32> to vector<8x128xf32>
    %40 = arith.mulf %37, %39 : vector<8x128xf32>
    %41 = arith.addf %36, %40 : vector<8x128xf32>
    %c5 = arith.constant 5 : index
    %c0_24 = arith.constant 0 : index
    %42 = vector.load %arg8[%c5, %c0_24] : memref<32x128xf32, #tpu.memory_space<vmem>>, vector<8x128xf32>
    %43 = vector.extract_strided_slice %16 {offsets = [5, 0], sizes = [1, 128], strides = [1, 1]} : vector<20x128xf32> to vector<1x128xf32>
    %44 = vector.broadcast %43 : vector<1x128xf32> to vector<8x128xf32>
    %45 = arith.mulf %42, %44 : vector<8x128xf32>
    %46 = arith.addf %41, %45 : vector<8x128xf32>
    %c6 = arith.constant 6 : index
    %c0_25 = arith.constant 0 : index
    %47 = vector.load %arg8[%c6, %c0_25] : memref<32x128xf32, #tpu.memory_space<vmem>>, vector<8x128xf32>
    %48 = vector.extract_strided_slice %16 {offsets = [6, 0], sizes = [1, 128], strides = [1, 1]} : vector<20x128xf32> to vector<1x128xf32>
    %49 = vector.broadcast %48 : vector<1x128xf32> to vector<8x128xf32>
    %50 = arith.mulf %47, %49 : vector<8x128xf32>
    %51 = arith.addf %46, %50 : vector<8x128xf32>
    %c7 = arith.constant 7 : index
    %c0_26 = arith.constant 0 : index
    %52 = vector.load %arg8[%c7, %c0_26] : memref<32x128xf32, #tpu.memory_space<vmem>>, vector<8x128xf32>
    %53 = vector.extract_strided_slice %16 {offsets = [7, 0], sizes = [1, 128], strides = [1, 1]} : vector<20x128xf32> to vector<1x128xf32>
    %54 = vector.broadcast %53 : vector<1x128xf32> to vector<8x128xf32>
    %55 = arith.mulf %52, %54 : vector<8x128xf32>
    %56 = arith.addf %51, %55 : vector<8x128xf32>
    %c8 = arith.constant 8 : index
    %c0_27 = arith.constant 0 : index
    %57 = vector.load %arg8[%c8, %c0_27] : memref<32x128xf32, #tpu.memory_space<vmem>>, vector<8x128xf32>
    %58 = vector.extract_strided_slice %16 {offsets = [8, 0], sizes = [1, 128], strides = [1, 1]} : vector<20x128xf32> to vector<1x128xf32>
    %59 = vector.broadcast %58 : vector<1x128xf32> to vector<8x128xf32>
    %60 = arith.mulf %57, %59 : vector<8x128xf32>
    %61 = arith.addf %56, %60 : vector<8x128xf32>
    %c9 = arith.constant 9 : index
    %c0_28 = arith.constant 0 : index
    %62 = vector.load %arg8[%c9, %c0_28] : memref<32x128xf32, #tpu.memory_space<vmem>>, vector<8x128xf32>
    %63 = vector.extract_strided_slice %16 {offsets = [9, 0], sizes = [1, 128], strides = [1, 1]} : vector<20x128xf32> to vector<1x128xf32>
    %64 = vector.broadcast %63 : vector<1x128xf32> to vector<8x128xf32>
    %65 = arith.mulf %62, %64 : vector<8x128xf32>
    %66 = arith.addf %61, %65 : vector<8x128xf32>
    %c10 = arith.constant 10 : index
    %c0_29 = arith.constant 0 : index
    %67 = vector.load %arg8[%c10, %c0_29] : memref<32x128xf32, #tpu.memory_space<vmem>>, vector<8x128xf32>
    %68 = vector.extract_strided_slice %16 {offsets = [10, 0], sizes = [1, 128], strides = [1, 1]} : vector<20x128xf32> to vector<1x128xf32>
    %69 = vector.broadcast %68 : vector<1x128xf32> to vector<8x128xf32>
    %70 = arith.mulf %67, %69 : vector<8x128xf32>
    %71 = arith.addf %66, %70 : vector<8x128xf32>
    %c11 = arith.constant 11 : index
    %c0_30 = arith.constant 0 : index
    %72 = vector.load %arg8[%c11, %c0_30] : memref<32x128xf32, #tpu.memory_space<vmem>>, vector<8x128xf32>
    %73 = vector.extract_strided_slice %16 {offsets = [11, 0], sizes = [1, 128], strides = [1, 1]} : vector<20x128xf32> to vector<1x128xf32>
    %74 = vector.broadcast %73 : vector<1x128xf32> to vector<8x128xf32>
    %75 = arith.mulf %72, %74 : vector<8x128xf32>
    %76 = arith.addf %71, %75 : vector<8x128xf32>
    %c12 = arith.constant 12 : index
    %c0_31 = arith.constant 0 : index
    %77 = vector.load %arg8[%c12, %c0_31] : memref<32x128xf32, #tpu.memory_space<vmem>>, vector<8x128xf32>
    %78 = vector.extract_strided_slice %16 {offsets = [12, 0], sizes = [1, 128], strides = [1, 1]} : vector<20x128xf32> to vector<1x128xf32>
    %79 = vector.broadcast %78 : vector<1x128xf32> to vector<8x128xf32>
    %80 = arith.mulf %77, %79 : vector<8x128xf32>
    %81 = arith.addf %76, %80 : vector<8x128xf32>
    %c13 = arith.constant 13 : index
    %c0_32 = arith.constant 0 : index
    %82 = vector.load %arg8[%c13, %c0_32] : memref<32x128xf32, #tpu.memory_space<vmem>>, vector<8x128xf32>
    %83 = vector.extract_strided_slice %16 {offsets = [13, 0], sizes = [1, 128], strides = [1, 1]} : vector<20x128xf32> to vector<1x128xf32>
    %84 = vector.broadcast %83 : vector<1x128xf32> to vector<8x128xf32>
    %85 = arith.mulf %82, %84 : vector<8x128xf32>
    %86 = arith.addf %81, %85 : vector<8x128xf32>
    %c14 = arith.constant 14 : index
    %c0_33 = arith.constant 0 : index
    %87 = vector.load %arg8[%c14, %c0_33] : memref<32x128xf32, #tpu.memory_space<vmem>>, vector<8x128xf32>
    %88 = vector.extract_strided_slice %16 {offsets = [14, 0], sizes = [1, 128], strides = [1, 1]} : vector<20x128xf32> to vector<1x128xf32>
    %89 = vector.broadcast %88 : vector<1x128xf32> to vector<8x128xf32>
    %90 = arith.mulf %87, %89 : vector<8x128xf32>
    %91 = arith.addf %86, %90 : vector<8x128xf32>
    %c15 = arith.constant 15 : index
    %c0_34 = arith.constant 0 : index
    %92 = vector.load %arg8[%c15, %c0_34] : memref<32x128xf32, #tpu.memory_space<vmem>>, vector<8x128xf32>
    %93 = vector.extract_strided_slice %16 {offsets = [15, 0], sizes = [1, 128], strides = [1, 1]} : vector<20x128xf32> to vector<1x128xf32>
    %94 = vector.broadcast %93 : vector<1x128xf32> to vector<8x128xf32>
    %95 = arith.mulf %92, %94 : vector<8x128xf32>
    %96 = arith.addf %91, %95 : vector<8x128xf32>
    %c16 = arith.constant 16 : index
    %c0_35 = arith.constant 0 : index
    %97 = vector.load %arg8[%c16, %c0_35] : memref<32x128xf32, #tpu.memory_space<vmem>>, vector<8x128xf32>
    %98 = vector.extract_strided_slice %16 {offsets = [16, 0], sizes = [1, 128], strides = [1, 1]} : vector<20x128xf32> to vector<1x128xf32>
    %99 = vector.broadcast %98 : vector<1x128xf32> to vector<8x128xf32>
    %100 = arith.mulf %97, %99 : vector<8x128xf32>
    %101 = arith.addf %96, %100 : vector<8x128xf32>
    %c17 = arith.constant 17 : index
    %c0_36 = arith.constant 0 : index
    %102 = vector.load %arg8[%c17, %c0_36] : memref<32x128xf32, #tpu.memory_space<vmem>>, vector<8x128xf32>
    %103 = vector.extract_strided_slice %16 {offsets = [17, 0], sizes = [1, 128], strides = [1, 1]} : vector<20x128xf32> to vector<1x128xf32>
    %104 = vector.broadcast %103 : vector<1x128xf32> to vector<8x128xf32>
    %105 = arith.mulf %102, %104 : vector<8x128xf32>
    %106 = arith.addf %101, %105 : vector<8x128xf32>
    %c18 = arith.constant 18 : index
    %c0_37 = arith.constant 0 : index
    %107 = vector.load %arg8[%c18, %c0_37] : memref<32x128xf32, #tpu.memory_space<vmem>>, vector<8x128xf32>
    %108 = vector.extract_strided_slice %16 {offsets = [18, 0], sizes = [1, 128], strides = [1, 1]} : vector<20x128xf32> to vector<1x128xf32>
    %109 = vector.broadcast %108 : vector<1x128xf32> to vector<8x128xf32>
    %110 = arith.mulf %107, %109 : vector<8x128xf32>
    %111 = arith.addf %106, %110 : vector<8x128xf32>
    %c19_38 = arith.constant 19 : index
    %c0_39 = arith.constant 0 : index
    %112 = vector.load %arg8[%c19_38, %c0_39] : memref<32x128xf32, #tpu.memory_space<vmem>>, vector<8x128xf32>
    %113 = vector.extract_strided_slice %16 {offsets = [19, 0], sizes = [1, 128], strides = [1, 1]} : vector<20x128xf32> to vector<1x128xf32>
    %114 = vector.broadcast %113 : vector<1x128xf32> to vector<8x128xf32>
    %115 = arith.mulf %112, %114 : vector<8x128xf32>
    %116 = arith.addf %111, %115 : vector<8x128xf32>
    %c0_40 = arith.constant 0 : index
    %c0_41 = arith.constant 0 : index
    %117 = vector.load %arg6[%c0_40, %c0_41] : memref<1x128xf32, #tpu.memory_space<vmem>>, vector<1x128xf32>
    %c20 = arith.constant 20 : index
    %c0_42 = arith.constant 0 : index
    %118 = vector.load %arg8[%c20, %c0_42] : memref<32x128xf32, #tpu.memory_space<vmem>>, vector<8x128xf32>
    %119 = vector.broadcast %117 : vector<1x128xf32> to vector<8x128xf32>
    %120 = arith.mulf %118, %119 : vector<8x128xf32>
    %121 = arith.addf %116, %120 : vector<8x128xf32>
    %122 = arith.addf %1, %121 : vector<8x128xf32>
    %c0_43 = arith.constant 0 : index
    %c0_44 = arith.constant 0 : index
    %c0_45 = arith.constant 0 : index
    %123 = vector.load %arg7[%c0_43, %c0_44, %c0_45] : memref<1x8x128xf32, #tpu.memory_space<vmem>>, vector<1x8x128xf32>
    %124 = vector.shape_cast %123 : vector<1x8x128xf32> to vector<8x128xf32>
    %125 = vector.shape_cast %122 : vector<8x128xf32> to vector<1x8x128xf32>
    tpu.vector_store %arg7[%c0_43, %c0_44, %c0_45], %125 {strides = array<i32>} : memref<1x8x128xf32, #tpu.memory_space<vmem>>, vector<1x8x128xf32>,
    return
  }
  func.func @transform_0(%arg0: i32) -> (i32, i32, i32) {
    %c0_i32 = arith.constant 0 : i32
    %c0_i32_0 = arith.constant 0 : i32
    %c0_i32_1 = arith.constant 0 : i32
    return %arg0, %c0_i32, %c0_i32_0 : i32, i32, i32
  }
  func.func @transform_1(%arg0: i32) -> (i32, i32) {
    %c0_i32 = arith.constant 0 : i32
    %c0_i32_0 = arith.constant 0 : i32
    %c0_i32_1 = arith.constant 0 : i32
    return %c0_i32, %c0_i32_0 : i32, i32
  }
  func.func @transform_2(%arg0: i32) -> (i32, i32) {
    %c0_i32 = arith.constant 0 : i32
    %c0_i32_0 = arith.constant 0 : i32
    %c0_i32_1 = arith.constant 0 : i32
    return %c0_i32, %c0_i32_0 : i32, i32
  }
  func.func @transform_3(%arg0: i32) -> (i32, i32) {
    %c0_i32 = arith.constant 0 : i32
    %c0_i32_0 = arith.constant 0 : i32
    %c0_i32_1 = arith.constant 0 : i32
    return %c0_i32, %c0_i32_0 : i32, i32
  }
  func.func @transform_4(%arg0: i32) -> (i32, i32) {
    %c0_i32 = arith.constant 0 : i32
    %c0_i32_0 = arith.constant 0 : i32
    %c0_i32_1 = arith.constant 0 : i32
    return %c0_i32, %c0_i32_0 : i32, i32
  }
  func.func @transform_5(%arg0: i32) -> (i32, i32) {
    %c0_i32 = arith.constant 0 : i32
    %c0_i32_0 = arith.constant 0 : i32
    %c0_i32_1 = arith.constant 0 : i32
    return %c0_i32, %c0_i32_0 : i32, i32
  }
  func.func @transform_6(%arg0: i32) -> (i32, i32, i32) {
    %c0_i32 = arith.constant 0 : i32
    %c0_i32_0 = arith.constant 0 : i32
    %c0_i32_1 = arith.constant 0 : i32
    return %arg0, %c0_i32, %c0_i32_0 : i32, i32, i32
  }
}

</mosaic_0001>

<llo_original>
// kernel: tpu_custom_call.1
$region0: #{tpu_custom_call.1}
  #allocation0 [shape = 'u32[]', space=smem, size = 0x4, offset = 0x4, fixed_abs, tag = 'smem constant byte address 0x4 - core index']
  #allocation1 [shape = 'u32[144,128]{1,0:T(1,128)}', space=vmem, size = 0x12000, scoped, tag = 'internal scratch']
  #allocation2 [shape = 'f32[32,128]{1,0:T(8,128)}', space=vmem, size = 0x4000, scoped, tag = 'scratch operand']
  %s0 = inlined_call_operand.hbm [shape: f32[2,8,128], index: 0, kind: input, shape index: {}]
  %s1 = inlined_call_operand.hbm [shape: f32[128,128], index: 1, kind: input, shape index: {}]
  %s2 = inlined_call_operand.vmem [shape: f32[1,128], index: 2, kind: input, shape index: {}]
  %s3 = inlined_call_operand.hbm [shape: f32[128,128], index: 3, kind: input, shape index: {}]
  %s4 = inlined_call_operand.hbm [shape: f32[20,128], index: 4, kind: input, shape index: {}]
  %s5 = inlined_call_operand.vmem [shape: f32[1,128], index: 5, kind: input, shape index: {}]
  %s6 = inlined_call_operand.hbm [shape: f32[2,8,128], index: 6, kind: output, shape index: {}]
  %s7 = sld [smem:[#allocation0]]
  $region73: #{tpu_custom_call.1} parent=0
    _
  %s9 = ssub.s32 1, %s7
  %s10 = scalar_select 0, %s9, %s7
  $region1: #{tpu_custom_call.1} parent=0
    #allocation3 [shape = 'u8[8192]{0}', space=vmem, size = 0x2000, scoped, tag = 'input window, operand 0']
    #allocation4 [shape = 's32[2]{0}', space=sflag, size = 0x8, scoped, tag = 'scoped memory for tpu_custom_call.1']
    #allocation5 [shape = 's32[2]{0}', space=sflag, size = 0x8, scoped, tag = 'scoped memory for tpu_custom_call.1']
    #allocation6 [shape = 'u8[65536]{0}', space=vmem, size = 0x10000, scoped, tag = 'input window, operand 1, single buffered']
    #allocation7 [shape = 's32[1]{0}', space=sflag, size = 0x4, scoped, tag = 'scoped memory for tpu_custom_call.1']
    #allocation8 [shape = 'u8[65536]{0}', space=vmem, size = 0x10000, scoped, tag = 'input window, operand 3, single buffered']
    #allocation9 [shape = 'u8[12288]{0}', space=vmem, size = 0x3000, scoped, tag = 'input window, operand 4, single buffered']
    #allocation10 [shape = 's32[1]{0}', space=sflag, size = 0x4, scoped, tag = 'scoped memory for tpu_custom_call.1']
    #allocation11 [shape = 'u8[8192]{0}', space=vmem, size = 0x2000, scoped, tag = 'output window, operand 0']
    %11 = vsyncpa [#allocation4], 0
    %s12 = scalar_lea.sflag [#allocation4], 1
    %13 = vsyncpa %s12, 0
    %14 = vsyncpa [#allocation7], 0
    %15 = vsyncpa [#allocation10], 0
    %16 = vsyncpa [#allocation5], 0
    %s17 = scalar_lea.sflag [#allocation5], 1
    %18 = vsyncpa %s17, 0
    loop: start=0, step=1, limit=4
    $region2: #{tpu_custom_call.1} parent=1 // loop_pre_header
      _
    $region3: #{tpu_custom_call.1} parent=1 // loop_header
      %s20 = sphi 0, %s24
      %p21 = scmp.ge.s32.totalorder %s20, 4
      %s30 = sphi 0, %s32
      %s33 = sphi 0, %s30
      %s34 = sphi 0, %s33
      %s50 = sphi 0, %s34
      %s54 = sphi 0, %s54
      %s56 = sphi 0, %s54
      %s57 = sphi 0, %s56
      %s71 = sphi 0, %s57
      %s75 = sphi 0, %s75
      %s77 = sphi 0, %s75
      %s78 = sphi 0, %s77
      %s92 = sphi 0, %s78
      %s96 = sphi 0, %s96
      %s98 = sphi 0, %s96
      %s99 = sphi 0, %s98
      %s113 = sphi 0, %s99
      %s117 = sphi 0, %s117
      %s119 = sphi 0, %s117
      %s120 = sphi 0, %s119
      %s134 = sphi 0, %s120
      %s138 = sphi 0, %s138
      %s140 = sphi 0, %s138
      %s141 = sphi 0, %s140
      %s155 = sphi 0, %s141
      %s161 = sphi 0, %s163
      %s164 = sphi 0, %s161
      %s165 = sphi 0, %s164
      %s181 = sphi 0, %s165
    $region4: #{tpu_custom_call.1} parent=1 // loop_header_branch
      %23 = sbr.rel (%p21) target = $region8
    $region5: #{tpu_custom_call.1} parent=1 // loop_body
      %s25 = ssub.s32 %s20, 1
      %s26 = ssub.s32 %s20, 2
      %s27 = sadd.s32 %s20, 1
      %s28 = ssub.s32 %s20, %s27
      %p29 = scmp.eq.s32.totalorder %s28, 0
      %s31 = sadd.s32 %s30, 1
      %s32 = scalar_select %p29, %s30, %s31
      %p35 = pneg %p29
      %p36 = scmp.eq.s32.totalorder %s20, 1
      %p37 = por %p35, %p36
      %p38 = scmp.ne.s32.totalorder %s30, %s33
      %p39 = scmp.eq.s32.totalorder %s20, 0
      %p40 = por %p38, %p39
      %p41 = scmp.ne.s32.totalorder %s30, %s33
      %p42 = scmp.eq.s32.totalorder %s25, 1
      %p43 = por %p41, %p42
      %p44 = scmp.ne.s32.totalorder %s33, %s34
      %p45 = scmp.eq.s32.totalorder %s25, 0
      %p46 = por %p44, %p45
      %p47 = scmp.ne.s32.totalorder %s33, %s34
      %p48 = scmp.eq.s32.totalorder %s26, 1
      %p49 = por %p47, %p48
      %p51 = scmp.ne.s32.totalorder %s34, %s50
      %p52 = scmp.eq.s32.totalorder %s26, 0
      %p53 = por %p51, %p52
      %s55 = sadd.s32 %s54, 1
      %p58 = scmp.eq.s32.totalorder %s20, 1
      %p59 = scmp.ne.s32.totalorder %s54, %s56
      %p60 = scmp.eq.s32.totalorder %s20, 0
      %p61 = por %p59, %p60
      %p62 = scmp.ne.s32.totalorder %s54, %s56
      %p63 = scmp.eq.s32.totalorder %s25, 1
      %p64 = por %p62, %p63
      %p65 = scmp.ne.s32.totalorder %s56, %s57
      %p66 = scmp.eq.s32.totalorder %s25, 0
      %p67 = por %p65, %p66
      %p68 = scmp.ne.s32.totalorder %s56, %s57
      %p69 = scmp.eq.s32.totalorder %s26, 1
      %p70 = por %p68, %p69
      %p72 = scmp.ne.s32.totalorder %s57, %s71
      %p73 = scmp.eq.s32.totalorder %s26, 0
      %p74 = por %p72, %p73
      %s76 = sadd.s32 %s75, 1
      %p79 = scmp.eq.s32.totalorder %s20, 1
      %p80 = scmp.ne.s32.totalorder %s75, %s77
      %p81 = scmp.eq.s32.totalorder %s20, 0
      %p82 = por %p80, %p81
      %p83 = scmp.ne.s32.totalorder %s75, %s77
      %p84 = scmp.eq.s32.totalorder %s25, 1
      %p85 = por %p83, %p84
      %p86 = scmp.ne.s32.totalorder %s77, %s78
      %p87 = scmp.eq.s32.totalorder %s25, 0
      %p88 = por %p86, %p87
      %p89 = scmp.ne.s32.totalorder %s77, %s78
      %p90 = scmp.eq.s32.totalorder %s26, 1
      %p91 = por %p89, %p90
      %p93 = scmp.ne.s32.totalorder %s78, %s92
      %p94 = scmp.eq.s32.totalorder %s26, 0
      %p95 = por %p93, %p94
      %s97 = sadd.s32 %s96, 1
      %p100 = scmp.eq.s32.totalorder %s20, 1
      %p101 = scmp.ne.s32.totalorder %s96, %s98
      %p102 = scmp.eq.s32.totalorder %s20, 0
      %p103 = por %p101, %p102
      %p104 = scmp.ne.s32.totalorder %s96, %s98
      %p105 = scmp.eq.s32.totalorder %s25, 1
      %p106 = por %p104, %p105
      %p107 = scmp.ne.s32.totalorder %s98, %s99
      %p108 = scmp.eq.s32.totalorder %s25, 0
      %p109 = por %p107, %p108
      %p110 = scmp.ne.s32.totalorder %s98, %s99
      %p111 = scmp.eq.s32.totalorder %s26, 1
      %p112 = por %p110, %p111
      %p114 = scmp.ne.s32.totalorder %s99, %s113
      %p115 = scmp.eq.s32.totalorder %s26, 0
      %p116 = por %p114, %p115
      %s118 = sadd.s32 %s117, 1
      %p121 = scmp.eq.s32.totalorder %s20, 1
      %p122 = scmp.ne.s32.totalorder %s117, %s119
      %p123 = scmp.eq.s32.totalorder %s20, 0
      %p124 = por %p122, %p123
      %p125 = scmp.ne.s32.totalorder %s117, %s119
      %p126 = scmp.eq.s32.totalorder %s25, 1
      %p127 = por %p125, %p126
      %p128 = scmp.ne.s32.totalorder %s119, %s120
      %p129 = scmp.eq.s32.totalorder %s25, 0
      %p130 = por %p128, %p129
      %p131 = scmp.ne.s32.totalorder %s119, %s120
      %p132 = scmp.eq.s32.totalorder %s26, 1
      %p133 = por %p131, %p132
      %p135 = scmp.ne.s32.totalorder %s120, %s134
      %p136 = scmp.eq.s32.totalorder %s26, 0
      %p137 = por %p135, %p136
      %s139 = sadd.s32 %s138, 1
      %p142 = scmp.eq.s32.totalorder %s20, 1
      %p143 = scmp.ne.s32.totalorder %s138, %s140
      %p144 = scmp.eq.s32.totalorder %s20, 0
      %p145 = por %p143, %p144
      %p146 = scmp.ne.s32.totalorder %s138, %s140
      %p147 = scmp.eq.s32.totalorder %s25, 1
      %p148 = por %p146, %p147
      %p149 = scmp.ne.s32.totalorder %s140, %s141
      %p150 = scmp.eq.s32.totalorder %s25, 0
      %p151 = por %p149, %p150
      %p152 = scmp.ne.s32.totalorder %s140, %s141
      %p153 = scmp.eq.s32.totalorder %s26, 1
      %p154 = por %p152, %p153
      %p156 = scmp.ne.s32.totalorder %s141, %s155
      %p157 = scmp.eq.s32.totalorder %s26, 0
      %p158 = por %p156, %p157
      %s159 = ssub.s32 %s20, %s27
      %p160 = scmp.eq.s32.totalorder %s159, 0
      %s162 = sadd.s32 %s161, 1
      %s163 = scalar_select %p160, %s161, %s162
      %p166 = pneg %p160
      %p167 = scmp.eq.s32.totalorder %s20, 1
      %p168 = por %p166, %p167
      %p169 = scmp.ne.s32.totalorder %s161, %s164
      %p170 = scmp.eq.s32.totalorder %s20, 0
      %p171 = por %p169, %p170
      %p172 = scmp.ne.s32.totalorder %s161, %s164
      %p173 = scmp.eq.s32.totalorder %s25, 1
      %p174 = por %p172, %p173
      %p175 = scmp.ne.s32.totalorder %s164, %s165
      %p176 = scmp.eq.s32.totalorder %s25, 0
      %p177 = por %p175, %p176
      %p178 = scmp.ne.s32.totalorder %s164, %s165
      %p179 = scmp.eq.s32.totalorder %s26, 1
      %p180 = por %p178, %p179
      %p182 = scmp.ne.s32.totalorder %s165, %s181
      %p183 = scmp.eq.s32.totalorder %s26, 0
      %p184 = por %p182, %p183
      %p185 = scmp.le.s32.totalorder 1, %s20
      %p186 = scmp.lt.s32.totalorder %s20, 3
      %p187 = pnand %p185, %p186
      %p188 = pneg %p187
      // Predicated region
      $region9: #{tpu_custom_call.1} parent=5 // pred_check
        _
      $region10: #{tpu_custom_call.1} parent=5 // pred_check_branch
        %190 = sbr.rel (%p187) target = $region12
      $region11: #{tpu_custom_call.1} parent=5 // pred_region
        %s191 = ssub.s32 %s20, 1
        // Predicated region
        $region13: #{tpu_custom_call.1} parent=11 // pred_check
          %p192 = pneg %p67
        $region14: #{tpu_custom_call.1} parent=11 // pred_check_branch
          %194 = sbr.rel (%p192) target = $region16
        $region15: #{tpu_custom_call.1} parent=11 // pred_region
          %s196 = ssub.s32 2048, 2048
          %197 = vsyncadd [#allocation7], %s196
          %s198 = sshll.u32 [#allocation6], 4
          %s199 = int_to_ptr.vmem [resolvable:$true] %s198
          %204 = dma.hbm_to_vmem [thread:$0]  %s1, 2048, %s199, [#allocation7], 128, 128, 8
        $region16: #{tpu_custom_call.1} parent=11 // pred_fallthru
          _
        // Predicated region
        $region17: #{tpu_custom_call.1} parent=11 // pred_check
          %p205 = pneg %p88
        $region18: #{tpu_custom_call.1} parent=11 // pred_check_branch
          %207 = sbr.rel (%p205) target = $region20
        $region19: #{tpu_custom_call.1} parent=11 // pred_region
          _
        $region20: #{tpu_custom_call.1} parent=11 // pred_fallthru
          _
        // Predicated region
        $region21: #{tpu_custom_call.1} parent=11 // pred_check
          %p208 = pneg %p109
        $region22: #{tpu_custom_call.1} parent=11 // pred_check_branch
          %210 = sbr.rel (%p208) target = $region24
        $region23: #{tpu_custom_call.1} parent=11 // pred_region
          %s212 = ssub.s32 2048, 2048
          %213 = vsyncadd [#allocation7], %s212
          %s214 = sshll.u32 [#allocation8], 4
          %s215 = int_to_ptr.vmem [resolvable:$true] %s214
          %220 = dma.hbm_to_vmem [thread:$0]  %s3, 2048, %s215, [#allocation7], 128, 128, 8
        $region24: #{tpu_custom_call.1} parent=11 // pred_fallthru
          _
        // Predicated region
        $region25: #{tpu_custom_call.1} parent=11 // pred_check
          %p221 = pneg %p130
        $region26: #{tpu_custom_call.1} parent=11 // pred_check_branch
          %223 = sbr.rel (%p221) target = $region28
        $region27: #{tpu_custom_call.1} parent=11 // pred_region
          %s225 = ssub.s32 384, 384
          %226 = vsyncadd [#allocation10], %s225
          %s227 = sshll.u32 [#allocation9], 4
          %s228 = int_to_ptr.vmem [resolvable:$true] %s227
          %233 = dma.hbm_to_vmem [thread:$0]  %s4, 384, %s228, [#allocation10], 128, 128, 8
        $region28: #{tpu_custom_call.1} parent=11 // pred_fallthru
          _
        // Predicated region
        $region29: #{tpu_custom_call.1} parent=11 // pred_check
          %p234 = pneg %p151
        $region30: #{tpu_custom_call.1} parent=11 // pred_check_branch
          %236 = sbr.rel (%p234) target = $region32
        $region31: #{tpu_custom_call.1} parent=11 // pred_region
          _
        $region32: #{tpu_custom_call.1} parent=11 // pred_fallthru
          _
      $region12: #{tpu_custom_call.1} parent=5 // pred_fallthru
        _
      %p237 = scmp.lt.s32.totalorder %s20, 2
      // Predicated region
      $region33: #{tpu_custom_call.1} parent=5 // pred_check
        %p238 = pneg %p237
      $region34: #{tpu_custom_call.1} parent=5 // pred_check_branch
        %240 = sbr.rel (%p238) target = $region36
      $region35: #{tpu_custom_call.1} parent=5 // pred_region
        // Predicated region
        $region37: #{tpu_custom_call.1} parent=35 // pred_check
          %p241 = pneg %p40
        $region38: #{tpu_custom_call.1} parent=35 // pred_check_branch
          %243 = sbr.rel (%p241) target = $region40
        $region39: #{tpu_custom_call.1} parent=35 // pred_region
          %s244 = sand.u32 %s30, 1
          %s245 = scalar_lea.sflag [#allocation4], %s244
          %s246 = sand.u32 %s30, 1
          %s247 = smul.addr %s246, 8
          %s248 = scalar_lea.vmem [#allocation3], %s247
          %s250 = ssub.s32 128, 128
          %251 = vsyncadd %s245, %s250
          %s252 = smul.addr %s20, 128
          %s253 = scalar_lea.hbm %s0, %s252
          %s255 = sshll.u32 %s248, 4
          %s256 = int_to_ptr.vmem [resolvable:$true] %s255
          %258 = dma.hbm_to_vmem [thread:$0]  %s253, 128, %s256, %s245
        $region40: #{tpu_custom_call.1} parent=35 // pred_fallthru
          _
      $region36: #{tpu_custom_call.1} parent=5 // pred_fallthru
        _
      %p259 = scmp.le.s32.totalorder 1, %s20
      %p260 = scmp.lt.s32.totalorder %s20, 3
      %p261 = pnand %p259, %p260
      %p262 = pneg %p261
      // Predicated region
      $region41: #{tpu_custom_call.1} parent=5 // pred_check
        _
      $region42: #{tpu_custom_call.1} parent=5 // pred_check_branch
        %264 = sbr.rel (%p261) target = $region44
      $region43: #{tpu_custom_call.1} parent=5 // pred_region
        %s265 = ssub.s32 %s20, 1
        %s266 = sand.u32 %s33, 1
        %s267 = scalar_lea.sflag [#allocation4], %s266
        %s268 = sand.u32 %s33, 1
        %s269 = smul.addr %s268, 8
        %s270 = scalar_lea.vmem [#allocation3], %s269
        // Predicated region
        $region45: #{tpu_custom_call.1} parent=43 // pred_check
          %p271 = pneg %p46
        $region46: #{tpu_custom_call.1} parent=43 // pred_check_branch
          %273 = sbr.rel (%p271) target = $region48
        $region47: #{tpu_custom_call.1} parent=43 // pred_region
          %274 = dma.done %s267, 128
        $region48: #{tpu_custom_call.1} parent=43 // pred_fallthru
          _
        // Predicated region
        $region49: #{tpu_custom_call.1} parent=43 // pred_check
          %p275 = pneg %p67
        $region50: #{tpu_custom_call.1} parent=43 // pred_check_branch
          %277 = sbr.rel (%p275) target = $region52
        $region51: #{tpu_custom_call.1} parent=43 // pred_region
          %278 = dma.done [#allocation7], 2048
        $region52: #{tpu_custom_call.1} parent=43 // pred_fallthru
          _
        // Predicated region
        $region53: #{tpu_custom_call.1} parent=43 // pred_check
          %p279 = pneg %p109
        $region54: #{tpu_custom_call.1} parent=43 // pred_check_branch
          %281 = sbr.rel (%p279) target = $region56
        $region55: #{tpu_custom_call.1} parent=43 // pred_region
          %282 = dma.done [#allocation7], 2048
        $region56: #{tpu_custom_call.1} parent=43 // pred_fallthru
          _
        // Predicated region
        $region57: #{tpu_custom_call.1} parent=43 // pred_check
          %p283 = pneg %p130
        $region58: #{tpu_custom_call.1} parent=43 // pred_check_branch
          %285 = sbr.rel (%p283) target = $region60
        $region59: #{tpu_custom_call.1} parent=43 // pred_region
          %286 = dma.done [#allocation10], 384
        $region60: #{tpu_custom_call.1} parent=43 // pred_fallthru
          _
        %s287 = sand.u32 %s33, 1
        %s288 = scalar_lea.sflag [#allocation4], %s287
        %s289 = sand.u32 %s33, 1
        %s290 = smul.addr %s289, 8
        %s291 = scalar_lea.vmem [#allocation3], %s290
        %p292 = pneg %p46
        %p293 = pneg %p43
        %p294 = pneg %p67
        %p295 = pneg %p64
        %p296 = pneg %p88
        %p297 = pneg %p85
        %p298 = pneg %p109
        %p299 = pneg %p106
        %p300 = pneg %p130
        %p301 = pneg %p127
        %p302 = pneg %p151
        %p303 = pneg %p148
        %p304 = pneg %p177
        %p305 = pneg %p174
        %s306 = sand.u32 %s164, 1
        %s307 = scalar_lea.sflag [#allocation5], %s306
        %s308 = sand.u32 %s164, 1
        %s309 = smul.addr %s308, 8
        %s310 = scalar_lea.vmem [#allocation11], %s309
        %v311 = vld [vmem:[%s270] sm:$0xff]
        %v312 = vld [vmem:[#allocation6] sm:$0xff]
        %v313 = vld [vmem:[#allocation6 + $0x8] sm:$0xff]
        %v314 = vld [vmem:[#allocation6 + $0x10] sm:$0xff]
        %v315 = vld [vmem:[#allocation6 + $0x18] sm:$0xff]
        %v316 = vld [vmem:[#allocation6 + $0x20] sm:$0xff]
        %v317 = vld [vmem:[#allocation6 + $0x28] sm:$0xff]
        %v318 = vld [vmem:[#allocation6 + $0x30] sm:$0xff]
        %v319 = vld [vmem:[#allocation6 + $0x38] sm:$0xff]
        %v320 = vld [vmem:[#allocation6 + $0x40] sm:$0xff]
        %v321 = vld [vmem:[#allocation6 + $0x48] sm:$0xff]
        %v322 = vld [vmem:[#allocation6 + $0x50] sm:$0xff]
        %v323 = vld [vmem:[#allocation6 + $0x58] sm:$0xff]
        %v324 = vld [vmem:[#allocation6 + $0x60] sm:$0xff]
        %v325 = vld [vmem:[#allocation6 + $0x68] sm:$0xff]
        %v326 = vld [vmem:[#allocation6 + $0x70] sm:$0xff]
        %v327 = vld [vmem:[#allocation6 + $0x78] sm:$0xff]
        %v328 = vld [vmem:[%s2] sm:$0x1]
        %v330 = vlaneseq
        %v331 = vshrl.u32 %v330, 7
        %v332 = vsub.s32 0, %v331
        %v333 = vrot.slane %v328, %v332
        %335 = vmatprep.subr.mxu0 0.0
        %336 = vmatpush1.msra.mxu0 %v312
        %337 = vmatprep.subr.mxu0 0.0
        %338 = vmatpush1.msra.mxu0 %v313
        %339 = vmatprep.subr.mxu0 0.0
        %340 = vmatpush1.msra.mxu0 %v314
        %341 = vmatprep.subr.mxu0 0.0
        %342 = vmatpush1.msra.mxu0 %v315
        %343 = vmatprep.subr.mxu0 0.0
        %344 = vmatpush1.msra.mxu0 %v316
        %345 = vmatprep.subr.mxu0 0.0
        %346 = vmatpush1.msra.mxu0 %v317
        %347 = vmatprep.subr.mxu0 0.0
        %348 = vmatpush1.msra.mxu0 %v318
        %349 = vmatprep.subr.mxu0 0.0
        %350 = vmatpush1.msra.mxu0 %v319
        %351 = vmatprep.subr.mxu0 0.0
        %352 = vmatpush1.msra.mxu0 %v320
        %353 = vmatprep.subr.mxu0 0.0
        %354 = vmatpush1.msra.mxu0 %v321
        %355 = vmatprep.subr.mxu0 0.0
        %356 = vmatpush1.msra.mxu0 %v322
        %357 = vmatprep.subr.mxu0 0.0
        %358 = vmatpush1.msra.mxu0 %v323
        %359 = vmatprep.subr.mxu0 0.0
        %360 = vmatpush1.msra.mxu0 %v324
        %361 = vmatprep.subr.mxu0 0.0
        %362 = vmatpush1.msra.mxu0 %v325
        %363 = vmatprep.subr.mxu0 0.0
        %364 = vmatpush1.msra.mxu0 %v326
        %365 = vmatprep.subr.mxu0 0.0
        %366 = vmatpush1.msra.mxu0 %v327
        %367 = vmatprep.subr.mxu0 0.0
        %368 = vmatpush1.msra.mxu0 0.0
        %369 = vmatprep.subr.mxu0 0.0
        %370 = vmatpush1.msra.mxu0 0.0
        %371 = vmatprep.subr.mxu0 0.0
        %372 = vmatpush1.msra.mxu0 0.0
        %373 = vmatprep.subr.mxu0 0.0
        %374 = vmatpush1.msra.mxu0 0.0
        %375 = vmatprep.subr.mxu0 0.0
        %376 = vmatpush1.msra.mxu0 0.0
        %377 = vmatprep.subr.mxu0 0.0
        %378 = vmatpush1.msra.mxu0 0.0
        %379 = vmatprep.subr.mxu0 0.0
        %380 = vmatpush1.msra.mxu0 0.0
        %381 = vmatprep.subr.mxu0 0.0
        %382 = vmatpush1.msra.mxu0 0.0
        %383 = vmatprep.subr.mxu0 0.0
        %384 = vmatpush1.msra.mxu0 0.0
        %385 = vmatprep.subr.mxu0 0.0
        %386 = vmatpush1.msra.mxu0 0.0
        %387 = vmatprep.subr.mxu0 0.0
        %388 = vmatpush1.msra.mxu0 0.0
        %389 = vmatprep.subr.mxu0 0.0
        %390 = vmatpush1.msra.mxu0 0.0
        %391 = vmatprep.subr.mxu0 0.0
        %392 = vmatpush1.msra.mxu0 0.0
        %393 = vmatprep.subr.mxu0 0.0
        %394 = vmatpush1.msra.mxu0 0.0
        %395 = vmatprep.subr.mxu0 0.0
        %396 = vmatpush1.msra.mxu0 0.0
        %397 = vmatprep.subr.mxu0 0.0
        %398 = vmatpush1.msra.mxu0 0.0
        %399 = vmatprep.mubr.f32.mxu0 0.0
        %400 = vmatmul.mubr.f32.gmra.mrb[0].mxu0 %v311
        %v401 = vpop.f32.mrb[0].mxu0
        %v402 = vadd.f32 %v333, %v401
        %v403 = vpop.f32.mrb[0].mxu0
        %404 = vdwg.mxu0
        %v405 = vmax.f32 %v402, 0.0
        %v406 = vld [vmem:[#allocation8] sm:$0xff]
        %v407 = vld [vmem:[#allocation8 + $0x8] sm:$0xff]
        %v408 = vld [vmem:[#allocation8 + $0x10] sm:$0xff]
        %v409 = vld [vmem:[#allocation8 + $0x18] sm:$0xff]
        %v410 = vld [vmem:[#allocation8 + $0x20] sm:$0xff]
        %v411 = vld [vmem:[#allocation8 + $0x28] sm:$0xff]
        %v412 = vld [vmem:[#allocation8 + $0x30] sm:$0xff]
        %v413 = vld [vmem:[#allocation8 + $0x38] sm:$0xff]
        %v414 = vld [vmem:[#allocation8 + $0x40] sm:$0xff]
        %v415 = vld [vmem:[#allocation8 + $0x48] sm:$0xff]
        %v416 = vld [vmem:[#allocation8 + $0x50] sm:$0xff]
        %v417 = vld [vmem:[#allocation8 + $0x58] sm:$0xff]
        %v418 = vld [vmem:[#allocation8 + $0x60] sm:$0xff]
        %v419 = vld [vmem:[#allocation8 + $0x68] sm:$0xff]
        %v420 = vld [vmem:[#allocation8 + $0x70] sm:$0xff]
        %v421 = vld [vmem:[#allocation8 + $0x78] sm:$0xff]
        %422 = vmatprep.subr.mxu0 0.0
        %423 = vmatpush1.msra.mxu0 %v406
        %424 = vmatprep.subr.mxu0 0.0
        %425 = vmatpush1.msra.mxu0 %v407
        %426 = vmatprep.subr.mxu0 0.0
        %427 = vmatpush1.msra.mxu0 %v408
        %428 = vmatprep.subr.mxu0 0.0
        %429 = vmatpush1.msra.mxu0 %v409
        %430 = vmatprep.subr.mxu0 0.0
        %431 = vmatpush1.msra.mxu0 %v410
        %432 = vmatprep.subr.mxu0 0.0
        %433 = vmatpush1.msra.mxu0 %v411
        %434 = vmatprep.subr.mxu0 0.0
        %435 = vmatpush1.msra.mxu0 %v412
        %436 = vmatprep.subr.mxu0 0.0
        %437 = vmatpush1.msra.mxu0 %v413
        %438 = vmatprep.subr.mxu0 0.0
        %439 = vmatpush1.msra.mxu0 %v414
        %440 = vmatprep.subr.mxu0 0.0
        %441 = vmatpush1.msra.mxu0 %v415
        %442 = vmatprep.subr.mxu0 0.0
        %443 = vmatpush1.msra.mxu0 %v416
        %444 = vmatprep.subr.mxu0 0.0
        %445 = vmatpush1.msra.mxu0 %v417
        %446 = vmatprep.subr.mxu0 0.0
        %447 = vmatpush1.msra.mxu0 %v418
        %448 = vmatprep.subr.mxu0 0.0
        %449 = vmatpush1.msra.mxu0 %v419
        %450 = vmatprep.subr.mxu0 0.0
        %451 = vmatpush1.msra.mxu0 %v420
        %452 = vmatprep.subr.mxu0 0.0
        %453 = vmatpush1.msra.mxu0 %v421
        %454 = vmatprep.subr.mxu0 0.0
        %455 = vmatpush1.msra.mxu0 0.0
        %456 = vmatprep.subr.mxu0 0.0
        %457 = vmatpush1.msra.mxu0 0.0
        %458 = vmatprep.subr.mxu0 0.0
        %459 = vmatpush1.msra.mxu0 0.0
        %460 = vmatprep.subr.mxu0 0.0
        %461 = vmatpush1.msra.mxu0 0.0
        %462 = vmatprep.subr.mxu0 0.0
        %463 = vmatpush1.msra.mxu0 0.0
        %464 = vmatprep.subr.mxu0 0.0
        %465 = vmatpush1.msra.mxu0 0.0
        %466 = vmatprep.subr.mxu0 0.0
        %467 = vmatpush1.msra.mxu0 0.0
        %468 = vmatprep.subr.mxu0 0.0
        %469 = vmatpush1.msra.mxu0 0.0
        %470 = vmatprep.subr.mxu0 0.0
        %471 = vmatpush1.msra.mxu0 0.0
        %472 = vmatprep.subr.mxu0 0.0
        %473 = vmatpush1.msra.mxu0 0.0
        %474 = vmatprep.subr.mxu0 0.0
        %475 = vmatpush1.msra.mxu0 0.0
        %476 = vmatprep.subr.mxu0 0.0
        %477 = vmatpush1.msra.mxu0 0.0
        %478 = vmatprep.subr.mxu0 0.0
        %479 = vmatpush1.msra.mxu0 0.0
        %480 = vmatprep.subr.mxu0 0.0
        %481 = vmatpush1.msra.mxu0 0.0
        %482 = vmatprep.subr.mxu0 0.0
        %483 = vmatpush1.msra.mxu0 0.0
        %484 = vmatprep.subr.mxu0 0.0
        %485 = vmatpush1.msra.mxu0 0.0
        %486 = vmatprep.mubr.f32.mxu0 0.0
        %487 = vmatmul.mubr.f32.gmra.mrb[0].mxu0 %v405
        %v488 = vpop.f32.mrb[0].mxu0
        %v489 = vadd.f32 0.0, %v488
        %v490 = vpop.f32.mrb[0].mxu0
        %491 = vdwg.mxu0
        %492 = vst [vmem:[#allocation2] sm:$0xff] 0.0
        %493 = vst [vmem:[#allocation2 + $0x8] sm:$0xff] 0.0
        %494 = vst [vmem:[#allocation2 + $0x10] sm:$0x7] 0.0
        %495 = vst [vmem:[#allocation2 + $0x1b] sm:$0x1f] 0.0
        %496 = vst [vmem:[#allocation2 + $0x13] sm:$0xff] %v489
        %v497 = vld [vmem:[#allocation9] sm:$0xff]
        %v498 = vld [vmem:[#allocation9 + $0x8] sm:$0xff]
        %v499 = vld [vmem:[#allocation9 + $0x10] sm:$0xf]
        %v500 = vld [vmem:[#allocation2] sm:$0xff]
        %v501 = vlaneseq
        %v502 = vshrl.u32 %v501, 7
        %v503 = vsub.s32 0, %v502
        %v504 = vrot.slane %v497, %v503
        %v505 = vmul.f32 %v500, %v504
        %v506 = vadd.f32 %v489, %v505
        %v507 = vld [vmem:[#allocation2 + $0x1] sm:$0xff]
        %v508 = vlaneseq
        %v509 = vshrl.u32 %v508, 7
        %v510 = vsub.s32 1, %v509
        %v511 = vrot.slane %v497, %v510
        %v512 = vmul.f32 %v507, %v511
        %v513 = vadd.f32 %v506, %v512
        %v514 = vld [vmem:[#allocation2 + $0x2] sm:$0xff]
        %v515 = vlaneseq
        %v516 = vshrl.u32 %v515, 7
        %v517 = vsub.s32 2, %v516
        %v518 = vrot.slane %v497, %v517
        %v519 = vmul.f32 %v514, %v518
        %v520 = vadd.f32 %v513, %v519
        %v521 = vld [vmem:[#allocation2 + $0x3] sm:$0xff]
        %v522 = vlaneseq
        %v523 = vshrl.u32 %v522, 7
        %v524 = vsub.s32 3, %v523
        %v525 = vrot.slane %v497, %v524
        %v526 = vmul.f32 %v521, %v525
        %v527 = vadd.f32 %v520, %v526
        %v528 = vld [vmem:[#allocation2 + $0x4] sm:$0xff]
        %v529 = vlaneseq
        %v530 = vshrl.u32 %v529, 7
        %v531 = vsub.s32 4, %v530
        %v532 = vrot.slane %v497, %v531
        %v533 = vmul.f32 %v528, %v532
        %v534 = vadd.f32 %v527, %v533
        %v535 = vld [vmem:[#allocation2 + $0x5] sm:$0xff]
        %v536 = vlaneseq
        %v537 = vshrl.u32 %v536, 7
        %v538 = vsub.s32 5, %v537
        %v539 = vrot.slane %v497, %v538
        %v540 = vmul.f32 %v535, %v539
        %v541 = vadd.f32 %v534, %v540
        %v542 = vld [vmem:[#allocation2 + $0x6] sm:$0xff]
        %v543 = vlaneseq
        %v544 = vshrl.u32 %v543, 7
        %v545 = vsub.s32 6, %v544
        %v546 = vrot.slane %v497, %v545
        %v547 = vmul.f32 %v542, %v546
        %v548 = vadd.f32 %v541, %v547
        %v549 = vld [vmem:[#allocation2 + $0x7] sm:$0xff]
        %v550 = vlaneseq
        %v551 = vshrl.u32 %v550, 7
        %v552 = vsub.s32 7, %v551
        %v553 = vrot.slane %v497, %v552
        %v554 = vmul.f32 %v549, %v553
        %v555 = vadd.f32 %v548, %v554
        %v556 = vld [vmem:[#allocation2 + $0x8] sm:$0xff]
        %v557 = vlaneseq
        %v558 = vshrl.u32 %v557, 7
        %v559 = vsub.s32 0, %v558
        %v560 = vrot.slane %v498, %v559
        %v561 = vmul.f32 %v556, %v560
        %v562 = vadd.f32 %v555, %v561
        %v563 = vld [vmem:[#allocation2 + $0x9] sm:$0xff]
        %v564 = vlaneseq
        %v565 = vshrl.u32 %v564, 7
        %v566 = vsub.s32 1, %v565
        %v567 = vrot.slane %v498, %v566
        %v568 = vmul.f32 %v563, %v567
        %v569 = vadd.f32 %v562, %v568
        %v570 = vld [vmem:[#allocation2 + $0xa] sm:$0xff]
        %v571 = vlaneseq
        %v572 = vshrl.u32 %v571, 7
        %v573 = vsub.s32 2, %v572
        %v574 = vrot.slane %v498, %v573
        %v575 = vmul.f32 %v570, %v574
        %v576 = vadd.f32 %v569, %v575
        %v577 = vld [vmem:[#allocation2 + $0xb] sm:$0xff]
        %v578 = vlaneseq
        %v579 = vshrl.u32 %v578, 7
        %v580 = vsub.s32 3, %v579
        %v581 = vrot.slane %v498, %v580
        %v582 = vmul.f32 %v577, %v581
        %v583 = vadd.f32 %v576, %v582
        %v584 = vld [vmem:[#allocation2 + $0xc] sm:$0xff]
        %v585 = vlaneseq
        %v586 = vshrl.u32 %v585, 7
        %v587 = vsub.s32 4, %v586
        %v588 = vrot.slane %v498, %v587
        %v589 = vmul.f32 %v584, %v588
        %v590 = vadd.f32 %v583, %v589
        %v591 = vld [vmem:[#allocation2 + $0xd] sm:$0xff]
        %v592 = vlaneseq
        %v593 = vshrl.u32 %v592, 7
        %v594 = vsub.s32 5, %v593
        %v595 = vrot.slane %v498, %v594
        %v596 = vmul.f32 %v591, %v595
        %v597 = vadd.f32 %v590, %v596
        %v598 = vld [vmem:[#allocation2 + $0xe] sm:$0xff]
        %v599 = vlaneseq
        %v600 = vshrl.u32 %v599, 7
        %v601 = vsub.s32 6, %v600
        %v602 = vrot.slane %v498, %v601
        %v603 = vmul.f32 %v598, %v602
        %v604 = vadd.f32 %v597, %v603
        %v605 = vld [vmem:[#allocation2 + $0xf] sm:$0xff]
        %v606 = vlaneseq
        %v607 = vshrl.u32 %v606, 7
        %v608 = vsub.s32 7, %v607
        %v609 = vrot.slane %v498, %v608
        %v610 = vmul.f32 %v605, %v609
        %v611 = vadd.f32 %v604, %v610
        %v612 = vld [vmem:[#allocation2 + $0x10] sm:$0xff]
        %v613 = vlaneseq
        %v614 = vshrl.u32 %v613, 7
        %v615 = vsub.s32 0, %v614
        %v616 = vrot.slane %v499, %v615
        %v617 = vmul.f32 %v612, %v616
        %v618 = vadd.f32 %v611, %v617
        %v619 = vld [vmem:[#allocation2 + $0x11] sm:$0xff]
        %v620 = vlaneseq
        %v621 = vshrl.u32 %v620, 7
        %v622 = vsub.s32 1, %v621
        %v623 = vrot.slane %v499, %v622
        %v624 = vmul.f32 %v619, %v623
        %v625 = vadd.f32 %v618, %v624
        %v626 = vld [vmem:[#allocation2 + $0x12] sm:$0xff]
        %v627 = vlaneseq
        %v628 = vshrl.u32 %v627, 7
        %v629 = vsub.s32 2, %v628
        %v630 = vrot.slane %v499, %v629
        %v631 = vmul.f32 %v626, %v630
        %v632 = vadd.f32 %v625, %v631
        %v633 = vld [vmem:[#allocation2 + $0x13] sm:$0xff]
        %v634 = vlaneseq
        %v635 = vshrl.u32 %v634, 7
        %v636 = vsub.s32 3, %v635
        %v637 = vrot.slane %v499, %v636
        %v638 = vmul.f32 %v633, %v637
        %v639 = vadd.f32 %v632, %v638
        %v640 = vld [vmem:[%s5] sm:$0x1]
        %v641 = vld [vmem:[#allocation2 + $0x14] sm:$0xff]
        %v643 = vlaneseq
        %v644 = vshrl.u32 %v643, 7
        %v645 = vsub.s32 0, %v644
        %v646 = vrot.slane %v640, %v645
        %v648 = vmul.f32 %v641, %v646
        %v649 = vadd.f32 %v639, %v648
        %v650 = vadd.f32 %v311, %v649
        %651 = vst [vmem:[%s310] sm:$0xff] %v650
        %s652 = sand.u32 %s164, 1
        %s653 = scalar_lea.sflag [#allocation5], %s652
        %s654 = sand.u32 %s164, 1
        %s655 = smul.addr %s654, 8
        %s656 = scalar_lea.vmem [#allocation11], %s655
        // Predicated region
        $region61: #{tpu_custom_call.1} parent=43 // pred_check
          %p657 = pneg %p174
        $region62: #{tpu_custom_call.1} parent=43 // pred_check_branch
          %659 = sbr.rel (%p657) target = $region64
        $region63: #{tpu_custom_call.1} parent=43 // pred_region
          %s661 = ssub.s32 128, 128
          %662 = vsyncadd %s653, %s661
          %s663 = smul.addr %s25, 128
          %s664 = scalar_lea.hbm %s6, %s663
          %s666 = sshll.u32 %s656, 4
          %s667 = int_to_ptr.vmem [resolvable:$true] %s666
          %669 = dma.vmem_to_hbm [thread:$0]  %s667, 128, %s664, %s653
        $region64: #{tpu_custom_call.1} parent=43 // pred_fallthru
          _
      $region44: #{tpu_custom_call.1} parent=5 // pred_fallthru
        _
      %p670 = scmp.le.s32.totalorder 2, %s20
      // Predicated region
      $region65: #{tpu_custom_call.1} parent=5 // pred_check
        %p671 = pneg %p670
      $region66: #{tpu_custom_call.1} parent=5 // pred_check_branch
        %673 = sbr.rel (%p671) target = $region68
      $region67: #{tpu_custom_call.1} parent=5 // pred_region
        %s674 = ssub.s32 %s20, 2
        // Predicated region
        $region69: #{tpu_custom_call.1} parent=67 // pred_check
          %p675 = pneg %p180
        $region70: #{tpu_custom_call.1} parent=67 // pred_check_branch
          %677 = sbr.rel (%p675) target = $region72
        $region71: #{tpu_custom_call.1} parent=67 // pred_region
          %s678 = sand.u32 %s165, 1
          %s679 = scalar_lea.sflag [#allocation5], %s678
          %s680 = sand.u32 %s165, 1
          %s681 = smul.addr %s680, 8
          %s682 = scalar_lea.vmem [#allocation11], %s681
          %683 = dma.done %s679, 128
        $region72: #{tpu_custom_call.1} parent=67 // pred_fallthru
          _
      $region68: #{tpu_custom_call.1} parent=5 // pred_fallthru
        _
    $region6: #{tpu_custom_call.1} parent=1 // loop_footer
      %s24 = sadd.s32 1, %s20
    $region7: #{tpu_custom_call.1} parent=1 // loop_footer_branch
      %19 = sbr.rel target = $region3
    $region8: #{tpu_custom_call.1} parent=1 // loop_exit
      _
    %684 = vsyncpa [#allocation4], 1
    %s685 = scalar_lea.sflag [#allocation4], 1
    %686 = vsyncpa %s685, 1
    %687 = vsyncpa [#allocation7], 1
    %688 = vsyncpa [#allocation10], 1
    %689 = vsyncpa [#allocation5], 1
    %s690 = scalar_lea.sflag [#allocation5], 1
    %691 = vsyncpa %s690, 1

</llo_original>
